<compile_context>
chip_gen: v6e
topology: v6e:2x2x1
jax: 0.10.0
libtpu: 0.0.40
codegen_flags: <defaults>
</compile_context>

<pallas_src>
import jax
import jax.numpy as jnp
from jax.experimental import pallas as pl
from jax.experimental.pallas import tpu as pltpu

H_BERT = 768       # BERT hidden size
H_FC1 = 256        # fc1 output
NUM_CLASSES = 3    # fc2 output
NC_PAD = 128       # lane-dense logits slab width
MAX_BS = 512       # max sequence-tile rows (fits v7x 64 MiB/TC with headroom)


def _round_up(x, m):
    return (x + m - 1) // m * m


def _head_kernel(h_ref, w_ref, w1_ref, b1_ref, w2_ref, b2_ref,
                 logits_ref, emb_ref, acc_ref):
    """One (batch-block i, sequence-block k) grid step.

    h_ref:  [BB, BS, 768]  activation tile (native dtype, upcast in-kernel)
    w_ref:  [BB, BS, 1]    pooling weight = mask / clamp(sum(mask), 1e-9); 0 on pad
    w1_ref: [768, 256]     fc1 weight (pre-transposed)   b1_ref: [1, 256]
    w2_ref: [256, 128]     fc2 weight (pre-transposed, zero-padded lanes)
    b2_ref: [1, 128]
    logits_ref: [BB, 128]  emb_ref: [BB, 256]  acc_ref: [BB, 768] f32 scratch
    """
    k = pl.program_id(1)

    @pl.when(k == 0)
    def _():
        acc_ref[...] = jnp.zeros_like(acc_ref)

    w = w_ref[...]                                # [BB, BS, 1] f32
    h = h_ref[...].astype(jnp.float32)            # per-tile upcast (bf16 stream)
    # where(w != 0) kills undefined data in partial edge blocks (the activation
    # is never padded in HBM), so garbage/NaN * 0 cannot leak into the sum.
    contrib = jnp.where(w != 0.0, h * w, 0.0)
    acc_ref[...] += jnp.sum(contrib, axis=1)      # sublane reduce -> [BB, 768]

    @pl.when(k == pl.num_programs(1) - 1)
    def _():
        pooled = acc_ref[...]                                          # [BB, 768]
        x_embed = jnp.dot(pooled, w1_ref[...],
                          preferred_element_type=jnp.float32) + b1_ref[...]
        emb_ref[...] = x_embed
        x = jnp.maximum(x_embed, 0.0)
        # TODO(synk): nn.Dropout(p=0.2) is identity in eval mode; training-mode
        # stochastic masking is not implemented here.
        logits_ref[...] = jnp.dot(x, w2_ref[...],
                                  preferred_element_type=jnp.float32) + b2_ref[...]


def prepare_params(w1, b1, w2, b2):
    """One-time parameter prep (not redone per forward call): transpose the
    nn.Linear weights to [in, out], lift biases to rows, zero-pad fc2 to a
    lane-dense 128-wide output slab."""
    nc = w2.shape[0]
    w1_t = jnp.asarray(w1, jnp.float32).T                          # [768, 256]
    b1_r = jnp.asarray(b1, jnp.float32).reshape(1, H_FC1)
    w2_t = jnp.asarray(w2, jnp.float32).T                          # [256, nc]
    w2_p = jnp.zeros((H_FC1, NC_PAD), jnp.float32).at[:, :nc].set(w2_t)
    b2_p = jnp.zeros((1, NC_PAD), jnp.float32).at[:, :nc].set(
        jnp.asarray(b2, jnp.float32))
    return w1_t, b1_r, w2_p, b2_p


def mymodel2_head(hidden_states, attention_mask, w1_t, b1_r, w2_p, b2_p,
                  *, num_classes=NUM_CLASSES):
    """hidden_states: [B, S, 768] (f32 or bf16 -- passed through untouched),
    attention_mask: [B, S]. Params from prepare_params().
    Returns (logits [B, nc] f32, x_embed [B, 256] f32)."""
    B, S, H = hidden_states.shape
    assert H == H_BERT

    # Fold the clamped denominator into per-token pooling weights: identical
    # math to sum(h*m, 1) / clamp(sum(m, 1), 1e-9); padded tokens get weight 0.
    mask_f = jnp.asarray(attention_mask, jnp.float32)
    denom = jnp.maximum(jnp.sum(mask_f, axis=1, keepdims=True), 1e-9)
    pool_w = (mask_f / denom)[:, :, None]                           # [B, S, 1]

    # ---- tiling (no padding / copying of the big activation) --------------
    BB = min(8, B)                       # batch rows per block
    if S <= MAX_BS:
        BS, seq_blocks = S, 1            # single full-extent sequence block
    else:
        seq_blocks = -(-S // MAX_BS)
        # Balanced tile, multiple of 128 (lane constraint for pool_w), <= 512.
        BS = _round_up(-(-S // seq_blocks), 128)
    S_pad = BS * seq_blocks
    batch_blocks = -(-B // BB)

    if S_pad != S:                       # pad ONLY the tiny pooling weights
        pool_w = jnp.pad(pool_w, ((0, 0), (0, S_pad - S), (0, 0)))

    grid = (batch_blocks, seq_blocks)

    # ---- honest VMEM budget (tile-padded sizes, double buffering) ---------
    isz = jnp.dtype(hidden_states.dtype).itemsize
    sub = lambda n: _round_up(n, 8)          # sublane padding
    lane = lambda n: _round_up(n, 128)       # lane padding
    per_buf = (BB * sub(BS) * lane(H_BERT) * isz          # h tile
               + BB * sub(BS) * lane(1) * 4               # pool_w (1 -> 128 lanes)
               + sub(BB) * lane(NC_PAD) * 4               # logits tile
               + sub(BB) * lane(H_FC1) * 4                # emb tile
               + (sub(H_BERT) * lane(H_FC1) + sub(1) * lane(H_FC1)
                  + sub(H_FC1) * lane(NC_PAD) + sub(1) * lane(NC_PAD)) * 4)
    vmem_need = 2 * per_buf + sub(BB) * lane(H_BERT) * 4  # + accumulator scratch
    # <= 48 MiB: safely inside v7x's 64 MiB/TC; v5e/v6e (128 MiB) get the full
    # BS=512 tile instead of the old 30 MiB-capped BS=256.
    vmem_limit = min(vmem_need + (8 << 20), 48 << 20)

    logits_pad, emb = pl.pallas_call(
        _head_kernel,
        out_shape=(
            jax.ShapeDtypeStruct((B, NC_PAD), jnp.float32),
            jax.ShapeDtypeStruct((B, H_FC1), jnp.float32),
        ),
        grid_spec=pltpu.PrefetchScalarGridSpec(
            num_scalar_prefetch=0,
            grid=grid,
            in_specs=[
                pl.BlockSpec((BB, BS, H_BERT), lambda i, k: (i, k, 0)),
                pl.BlockSpec((BB, BS, 1), lambda i, k: (i, k, 0)),
                pl.BlockSpec((H_BERT, H_FC1), lambda i, k: (0, 0)),
                pl.BlockSpec((1, H_FC1), lambda i, k: (0, 0)),
                pl.BlockSpec((H_FC1, NC_PAD), lambda i, k: (0, 0)),
                pl.BlockSpec((1, NC_PAD), lambda i, k: (0, 0)),
            ],
            out_specs=[
                pl.BlockSpec((BB, NC_PAD), lambda i, k: (i, 0)),
                pl.BlockSpec((BB, H_FC1), lambda i, k: (i, 0)),
            ],
            scratch_shapes=[pltpu.VMEM((BB, H_BERT), jnp.float32)],
        ),
        compiler_params=pltpu.CompilerParams(
            dimension_semantics=("parallel", "arbitrary"),
            vmem_limit_bytes=vmem_limit,
        ),
    )(hidden_states, pool_w, w1_t, b1_r, w2_p, b2_p)

    return logits_pad[:, :num_classes], emb


def _reference(hidden_states, attention_mask, w1, b1, w2, b2):
    h = hidden_states.astype(jnp.float32)
    m = attention_mask.astype(jnp.float32)[:, :, None]
    pooled = jnp.sum(h * m, axis=1) / jnp.maximum(jnp.sum(m, axis=1), 1e-9)
    x_embed = pooled @ w1.T + b1
    x = jnp.maximum(x_embed, 0.0)
    logits = x @ w2.T + b2
    return logits, x_embed


if __name__ == "__main__":
    key = jax.random.PRNGKey(0)
    kh1, kw1, kb1, kw2, kb2, kh2, kh3, km3 = jax.random.split(key, 8)

    # nn.Linear shapes: weight [out, in], bias [out].
    w1 = jax.random.normal(kw1, (H_FC1, H_BERT), dtype=jnp.float32) * 0.02
    b1 = jax.random.normal(kb1, (H_FC1,), dtype=jnp.float32) * 0.02
    w2 = jax.random.normal(kw2, (NUM_CLASSES, H_FC1), dtype=jnp.float32) * 0.02
    b2 = jax.random.normal(kb2, (NUM_CLASSES,), dtype=jnp.float32) * 0.02
    params = prepare_params(w1, b1, w2, b2)   # once, not per forward call

    fwd = jax.jit(mymodel2_head)

    def _check(hs, am, atol):
        logits, x_embed = fwd(hs, am, *params)
        jax.block_until_ready((logits, x_embed))
        ref_logits, ref_embed = _reference(hs, am, w1, b1, w2, b2)
        assert logits.shape == (hs.shape[0], NUM_CLASSES)
        assert x_embed.shape == (hs.shape[0], H_FC1)
        assert jnp.allclose(logits, ref_logits, atol=atol, rtol=1e-3), \
            float(jnp.max(jnp.abs(logits - ref_logits)))
        assert jnp.allclose(x_embed, ref_embed, atol=atol, rtol=1e-3), \
            float(jnp.max(jnp.abs(x_embed - ref_embed)))

    # Case 1: f32, B=2, S=8 (synthetic stand-in for bert(...).last_hidden_state).
    hs1 = jax.random.normal(kh1, (2, 8, H_BERT), dtype=jnp.float32)
    am1 = jnp.ones((2, 8), dtype=jnp.float32).at[1, 5:].set(0.0)
    _check(hs1, am1, atol=1e-4)

    # Case 2: f32, B=3, S=12 (batch not a multiple of 8, masked tails).
    hs2 = jax.random.normal(kh2, (3, 12, H_BERT), dtype=jnp.float32)
    am2 = jnp.ones((3, 12), dtype=jnp.float32).at[0, 9:].set(0.0).at[2, 4:].set(0.0)
    _check(hs2, am2, atol=1e-4)

    # Case 3: bf16 activation stream, B=9, S=600 — exercises the native-dtype
    # path, multi-step sequence accumulation, partial batch/sequence edge
    # blocks (no activation padding), and >= 2 parallel batch blocks.
    hs3 = jax.random.normal(kh3, (9, 600, H_BERT),
                            dtype=jnp.float32).astype(jnp.bfloat16)
    am3 = (jax.random.uniform(km3, (9, 600)) > 0.2).astype(jnp.float32)
    am3 = am3.at[:, 0].set(1.0)          # every row keeps at least one token
    _check(hs3, am3, atol=2e-3)

    print("KERNEL_OK")
</pallas_src>

<mosaic_0001>
module attributes {stable_mosaic.version = 11 : i64} {
  func.func @_head_kernel(%arg0: i32, %arg1: i32, %arg2: memref<2x8x768xf32, #tpu.memory_space<vmem>>, %arg3: memref<2x8x1xf32, #tpu.memory_space<vmem>>, %arg4: memref<768x256xf32, #tpu.memory_space<vmem>>, %arg5: memref<1x256xf32, #tpu.memory_space<vmem>>, %arg6: memref<256x128xf32, #tpu.memory_space<vmem>>, %arg7: memref<1x128xf32, #tpu.memory_space<vmem>>, %arg8: memref<2x128xf32, #tpu.memory_space<vmem>>, %arg9: memref<2x256xf32, #tpu.memory_space<vmem>>, %arg10: memref<2x768xf32, #tpu.memory_space<vmem>>) attributes {dimension_semantics = [#tpu.dimension_semantics<parallel>, #tpu.dimension_semantics<arbitrary>], iteration_bounds = array<i64: 1, 1>, scalar_prefetch = 0 : i64, scratch_operands = 1 : i64, tpu.core_type = #tpu.core_type<tc>, window_params = [{transform_indices = @transform_0, window_bounds = array<i64: 2, 8, 768>}, {transform_indices = @transform_1, window_bounds = array<i64: 2, 8, 1>}, {pipeline_mode = #tpu.pipeline_mode<synchronous>, transform_indices = @transform_2, window_bounds = array<i64: 768, 256>}, {pipeline_mode = #tpu.pipeline_mode<synchronous>, transform_indices = @transform_3, window_bounds = array<i64: 1, 256>}, {pipeline_mode = #tpu.pipeline_mode<synchronous>, transform_indices = @transform_4, window_bounds = array<i64: 256, 128>}, {pipeline_mode = #tpu.pipeline_mode<synchronous>, transform_indices = @transform_5, window_bounds = array<i64: 1, 128>}, {transform_indices = @transform_6, window_bounds = array<i64: 2, 128>}, {transform_indices = @transform_7, window_bounds = array<i64: 2, 256>}]} {
    %c0_i32 = arith.constant 0 : i32
    %0 = arith.cmpi eq, %arg1, %c0_i32 : i32
    %1 = arith.extui %0 : i1 to i32
    %c0_i32_0 = arith.constant 0 : i32
    %2 = arith.cmpi ne, %1, %c0_i32_0 : i32
    scf.if %2 {
      %cst_14 = arith.constant 0.000000e+00 : f32
      %20 = vector.broadcast %cst_14 : f32 to vector<2x768xf32>
      %c0_15 = arith.constant 0 : index
      %c0_16 = arith.constant 0 : index
      %21 = vector.load %arg10[%c0_15, %c0_16] : memref<2x768xf32, #tpu.memory_space<vmem>>, vector<2x768xf32>
      tpu.vector_store %arg10[%c0_15, %c0_16], %20 {strides = array<i32>} : memref<2x768xf32, #tpu.memory_space<vmem>>, vector<2x768xf32>,
    } else {
    }
    %c0 = arith.constant 0 : index
    %c0_1 = arith.constant 0 : index
    %c0_2 = arith.constant 0 : index
    %3 = vector.load %arg3[%c0, %c0_1, %c0_2] : memref<2x8x1xf32, #tpu.memory_space<vmem>>, vector<2x8x1xf32>
    %c0_3 = arith.constant 0 : index
    %c0_4 = arith.constant 0 : index
    %c0_5 = arith.constant 0 : index
    %4 = vector.load %arg2[%c0_3, %c0_4, %c0_5] : memref<2x8x768xf32, #tpu.memory_space<vmem>>, vector<2x8x768xf32>
    %cst = arith.constant 0.000000e+00 : f32
    %5 = vector.broadcast %cst : f32 to vector<2x8x1xf32>
    %6 = arith.cmpf one, %3, %5 : vector<2x8x1xf32>
    %7 = vector.broadcast %3 : vector<2x8x1xf32> to vector<2x8x768xf32>
    %8 = arith.mulf %4, %7 : vector<2x8x768xf32>
    %cst_6 = arith.constant 0.000000e+00 : f32
    %9 = vector.shape_cast %6 : vector<2x8x1xi1> to vector<2x8x1xi1>
    %10 = vector.broadcast %9 : vector<2x8x1xi1> to vector<2x8x768xi1>
    %11 = vector.broadcast %cst_6 : f32 to vector<2x8x768xf32>
    %12 = arith.select %10, %8, %11 : vector<2x8x768xi1>, vector<2x8x768xf32>
    %c0_7 = arith.constant 0 : index
    %c0_8 = arith.constant 0 : index
    %13 = vector.load %arg10[%c0_7, %c0_8] : memref<2x768xf32, #tpu.memory_space<vmem>>, vector<2x768xf32>
    %cst_9 = arith.constant dense<0.000000e+00> : vector<2x768xf32>
    %14 = vector.multi_reduction <add>, %12, %cst_9 [1] : vector<2x8x768xf32> to vector<2x768xf32>
    %15 = arith.addf %13, %14 : vector<2x768xf32>
    %c0_10 = arith.constant 0 : index
    %c0_11 = arith.constant 0 : index
    %16 = vector.load %arg10[%c0_10, %c0_11] : memref<2x768xf32, #tpu.memory_space<vmem>>, vector<2x768xf32>
    tpu.vector_store %arg10[%c0_10, %c0_11], %15 {strides = array<i32>} : memref<2x768xf32, #tpu.memory_space<vmem>>, vector<2x768xf32>,
    %c0_i32_12 = arith.constant 0 : i32
    %17 = arith.cmpi eq, %arg1, %c0_i32_12 : i32
    %18 = arith.extui %17 : i1 to i32
    %c0_i32_13 = arith.constant 0 : i32
    %19 = arith.cmpi ne, %18, %c0_i32_13 : i32
    scf.if %19 {
      %c0_14 = arith.constant 0 : index
      %c0_15 = arith.constant 0 : index
      %20 = vector.load %arg10[%c0_14, %c0_15] : memref<2x768xf32, #tpu.memory_space<vmem>>, vector<2x768xf32>
      %c0_16 = arith.constant 0 : index
      %c0_17 = arith.constant 0 : index
      %21 = vector.load %arg4[%c0_16, %c0_17] : memref<768x256xf32, #tpu.memory_space<vmem>>, vector<768x256xf32>
      %cst_18 = arith.constant dense<0.000000e+00> : vector<2x256xf32>
      %22 = tpu.matmul %20, %21, %cst_18 {dimension_numbers = #tpu.dot_dimension_numbers<[1], [0], [0], [1], [0, 0, 1, 1], [], []>} : vector<2x768xf32>, vector<768x256xf32>, vector<2x256xf32> -> vector<2x256xf32>
      %c0_19 = arith.constant 0 : index
      %c0_20 = arith.constant 0 : index
      %23 = vector.load %arg5[%c0_19, %c0_20] : memref<1x256xf32, #tpu.memory_space<vmem>>, vector<1x256xf32>
      %24 = vector.broadcast %23 : vector<1x256xf32> to vector<2x256xf32>
      %25 = arith.addf %22, %24 : vector<2x256xf32>
      %c0_21 = arith.constant 0 : index
      %c0_22 = arith.constant 0 : index
      %26 = vector.load %arg9[%c0_21, %c0_22] : memref<2x256xf32, #tpu.memory_space<vmem>>, vector<2x256xf32>
      tpu.vector_store %arg9[%c0_21, %c0_22], %25 {strides = array<i32>} : memref<2x256xf32, #tpu.memory_space<vmem>>, vector<2x256xf32>,
      %cst_23 = arith.constant 0.000000e+00 : f32
      %27 = vector.broadcast %cst_23 : f32 to vector<2x256xf32>
      %28 = arith.maximumf %25, %27 : vector<2x256xf32>
      %c0_24 = arith.constant 0 : index
      %c0_25 = arith.constant 0 : index
      %29 = vector.load %arg6[%c0_24, %c0_25] : memref<256x128xf32, #tpu.memory_space<vmem>>, vector<256x128xf32>
      %cst_26 = arith.constant dense<0.000000e+00> : vector<2x128xf32>
      %30 = tpu.matmul %28, %29, %cst_26 {dimension_numbers = #tpu.dot_dimension_numbers<[1], [0], [0], [1], [0, 0, 1, 1], [], []>} : vector<2x256xf32>, vector<256x128xf32>, vector<2x128xf32> -> vector<2x128xf32>
      %c0_27 = arith.constant 0 : index
      %c0_28 = arith.constant 0 : index
      %31 = vector.load %arg7[%c0_27, %c0_28] : memref<1x128xf32, #tpu.memory_space<vmem>>, vector<1x128xf32>
      %32 = vector.broadcast %31 : vector<1x128xf32> to vector<2x128xf32>
      %33 = arith.addf %30, %32 : vector<2x128xf32>
      %c0_29 = arith.constant 0 : index
      %c0_30 = arith.constant 0 : index
      %34 = vector.load %arg8[%c0_29, %c0_30] : memref<2x128xf32, #tpu.memory_space<vmem>>, vector<2x128xf32>
      tpu.vector_store %arg8[%c0_29, %c0_30], %33 {strides = array<i32>} : memref<2x128xf32, #tpu.memory_space<vmem>>, vector<2x128xf32>,
    } else {
    }
    return
  }
  func.func @transform_0(%arg0: i32, %arg1: i32) -> (i32, i32, i32) {
    %c0_i32 = arith.constant 0 : i32
    %c0_i32_0 = arith.constant 0 : i32
    return %arg0, %arg1, %c0_i32 : i32, i32, i32
  }
  func.func @transform_1(%arg0: i32, %arg1: i32) -> (i32, i32, i32) {
    %c0_i32 = arith.constant 0 : i32
    %c0_i32_0 = arith.constant 0 : i32
    return %arg0, %arg1, %c0_i32 : i32, i32, i32
  }
  func.func @transform_2(%arg0: i32, %arg1: i32) -> (i32, i32) {
    %c0_i32 = arith.constant 0 : i32
    %c0_i32_0 = arith.constant 0 : i32
    %c0_i32_1 = arith.constant 0 : i32
    return %c0_i32, %c0_i32_0 : i32, i32
  }
  func.func @transform_3(%arg0: i32, %arg1: i32) -> (i32, i32) {
    %c0_i32 = arith.constant 0 : i32
    %c0_i32_0 = arith.constant 0 : i32
    %c0_i32_1 = arith.constant 0 : i32
    return %c0_i32, %c0_i32_0 : i32, i32
  }
  func.func @transform_4(%arg0: i32, %arg1: i32) -> (i32, i32) {
    %c0_i32 = arith.constant 0 : i32
    %c0_i32_0 = arith.constant 0 : i32
    %c0_i32_1 = arith.constant 0 : i32
    return %c0_i32, %c0_i32_0 : i32, i32
  }
  func.func @transform_5(%arg0: i32, %arg1: i32) -> (i32, i32) {
    %c0_i32 = arith.constant 0 : i32
    %c0_i32_0 = arith.constant 0 : i32
    %c0_i32_1 = arith.constant 0 : i32
    return %c0_i32, %c0_i32_0 : i32, i32
  }
  func.func @transform_6(%arg0: i32, %arg1: i32) -> (i32, i32) {
    %c0_i32 = arith.constant 0 : i32
    %c0_i32_0 = arith.constant 0 : i32
    return %arg0, %c0_i32 : i32, i32
  }
  func.func @transform_7(%arg0: i32, %arg1: i32) -> (i32, i32) {
    %c0_i32 = arith.constant 0 : i32
    %c0_i32_0 = arith.constant 0 : i32
    return %arg0, %c0_i32 : i32, i32
  }
}

</mosaic_0001>

<llo_original>
// kernel: mymodel2_head.1
$region0: #{mymodel2_head.1}
  #allocation0 [shape = 'u32[]', space=smem, size = 0x4, offset = 0x4, fixed_abs, tag = 'smem constant byte address 0x4 - core index']
  #allocation1 [shape = 'u32[144,128]{1,0:T(1,128)}', space=vmem, size = 0x12000, scoped, tag = 'internal scratch']
  #allocation2 [shape = 'f32[2,768]{1,0:T(2,128)}', space=vmem, size = 0x1800, scoped, tag = 'scratch operand']
  %s0 = inlined_call_operand.hbm [shape: f32[2,8,768], index: 0, kind: input, shape index: {}]
  %s1 = inlined_call_operand.vmem [shape: f32[2,8,1], index: 1, kind: input, shape index: {}]
  %s2 = inlined_call_operand.hbm [shape: f32[768,256], index: 2, kind: input, shape index: {}]
  %s3 = inlined_call_operand.vmem [shape: f32[1,256], index: 3, kind: input, shape index: {}]
  %s4 = inlined_call_operand.hbm [shape: f32[256,128], index: 4, kind: input, shape index: {}]
  %s5 = inlined_call_operand.vmem [shape: f32[1,128], index: 5, kind: input, shape index: {}]
  %s6 = inlined_call_operand.hbm [shape: f32[2,128], index: 6, kind: output, shape index: {0}]
  %s7 = inlined_call_operand.hbm [shape: f32[2,256], index: 7, kind: output, shape index: {1}]
  %8 = xla_tuple %s6, %s7
  %s9 = sld [smem:[#allocation0]]
  $region62: #{mymodel2_head.1} parent=0
    _
  %s11 = ssub.s32 1, %s9
  %s12 = scalar_select 0, %s11, %s9
  $region1: #{mymodel2_head.1} parent=0
    #allocation3 [shape = 'u8[49152]{0}', space=vmem, size = 0xc000, scoped, tag = 'input window, operand 0, single buffered']
    #allocation4 [shape = 's32[1]{0}', space=sflag, size = 0x4, scoped, tag = 'scoped memory for mymodel2_head.1']
    #allocation5 [shape = 's32[1]{0}', space=sflag, size = 0x4, scoped, tag = 'scoped memory for mymodel2_head.1']
    #allocation6 [shape = 'u8[786432]{0}', space=vmem, size = 0xc0000, scoped, tag = 'input window, operand 2, single buffered']
    #allocation7 [shape = 's32[1]{0}', space=sflag, size = 0x4, scoped, tag = 'scoped memory for mymodel2_head.1']
    #allocation8 [shape = 'u8[131072]{0}', space=vmem, size = 0x20000, scoped, tag = 'input window, operand 4, single buffered']
    #allocation9 [shape = 'u8[1024]{0}', space=vmem, size = 0x400, scoped, tag = 'output window, operand 0, single buffered']
    #allocation10 [shape = 'u8[2048]{0}', space=vmem, size = 0x800, scoped, tag = 'output window, operand 1, single buffered']
    #allocation11 [shape = 's32[1]{0}', space=sflag, size = 0x4, scoped, tag = 'scoped memory for mymodel2_head.1']
    %13 = vsyncpa [#allocation4], 0
    %14 = vsyncpa [#allocation7], 0
    %15 = vsyncpa [#allocation5], 0
    %16 = vsyncpa [#allocation11], 0
    // Predicated region
    $region2: #{mymodel2_head.1} parent=1 // pred_check
      _
    $region3: #{mymodel2_head.1} parent=1 // pred_check_branch
      %18 = sbr.rel (0) target = $region5
    $region4: #{mymodel2_head.1} parent=1 // pred_region
      %s20 = ssub.s32 1536, 1536
      %21 = vsyncadd [#allocation4], %s20
      %s22 = sshll.u32 [#allocation3], 4
      %s23 = int_to_ptr.vmem [resolvable:$true] %s22
      %28 = dma.hbm_to_vmem [thread:$0]  %s0, 1536, %s23, [#allocation4], 768, 768, 48
    $region5: #{mymodel2_head.1} parent=1 // pred_fallthru
      _
    // Predicated region
    $region6: #{mymodel2_head.1} parent=1 // pred_check
      _
    $region7: #{mymodel2_head.1} parent=1 // pred_check_branch
      %30 = sbr.rel (0) target = $region9
    $region8: #{mymodel2_head.1} parent=1 // pred_region
      _
    $region9: #{mymodel2_head.1} parent=1 // pred_fallthru
      _
    // Predicated region
    $region10: #{mymodel2_head.1} parent=1 // pred_check
      _
    $region11: #{mymodel2_head.1} parent=1 // pred_check_branch
      %32 = sbr.rel (0) target = $region13
    $region12: #{mymodel2_head.1} parent=1 // pred_region
      %s34 = ssub.s32 24576, 24576
      %35 = vsyncadd [#allocation7], %s34
      %s36 = sshll.u32 [#allocation6], 4
      %s37 = int_to_ptr.vmem [resolvable:$true] %s36
      %42 = dma.hbm_to_vmem [thread:$0]  %s2, 24576, %s37, [#allocation7], 256, 256, 16
    $region13: #{mymodel2_head.1} parent=1 // pred_fallthru
      _
    // Predicated region
    $region14: #{mymodel2_head.1} parent=1 // pred_check
      _
    $region15: #{mymodel2_head.1} parent=1 // pred_check_branch
      %44 = sbr.rel (0) target = $region17
    $region16: #{mymodel2_head.1} parent=1 // pred_region
      _
    $region17: #{mymodel2_head.1} parent=1 // pred_fallthru
      _
    // Predicated region
    $region18: #{mymodel2_head.1} parent=1 // pred_check
      _
    $region19: #{mymodel2_head.1} parent=1 // pred_check_branch
      %46 = sbr.rel (0) target = $region21
    $region20: #{mymodel2_head.1} parent=1 // pred_region
      %s48 = ssub.s32 4096, 4096
      %49 = vsyncadd [#allocation7], %s48
      %s50 = sshll.u32 [#allocation8], 4
      %s51 = int_to_ptr.vmem [resolvable:$true] %s50
      %56 = dma.hbm_to_vmem [thread:$0]  %s4, 4096, %s51, [#allocation7], 128, 128, 8
    $region21: #{mymodel2_head.1} parent=1 // pred_fallthru
      _
    // Predicated region
    $region22: #{mymodel2_head.1} parent=1 // pred_check
      _
    $region23: #{mymodel2_head.1} parent=1 // pred_check_branch
      %58 = sbr.rel (0) target = $region25
    $region24: #{mymodel2_head.1} parent=1 // pred_region
      _
    $region25: #{mymodel2_head.1} parent=1 // pred_fallthru
      _
    // Predicated region
    $region26: #{mymodel2_head.1} parent=1 // pred_check
      _
    $region27: #{mymodel2_head.1} parent=1 // pred_check_branch
      %60 = sbr.rel (0) target = $region29
    $region28: #{mymodel2_head.1} parent=1 // pred_region
      %61 = dma.done [#allocation4], 1536
    $region29: #{mymodel2_head.1} parent=1 // pred_fallthru
      _
    // Predicated region
    $region30: #{mymodel2_head.1} parent=1 // pred_check
      _
    $region31: #{mymodel2_head.1} parent=1 // pred_check_branch
      %63 = sbr.rel (0) target = $region33
    $region32: #{mymodel2_head.1} parent=1 // pred_region
      %64 = dma.done [#allocation7], 24576
    $region33: #{mymodel2_head.1} parent=1 // pred_fallthru
      _
    // Predicated region
    $region34: #{mymodel2_head.1} parent=1 // pred_check
      _
    $region35: #{mymodel2_head.1} parent=1 // pred_check_branch
      %66 = sbr.rel (0) target = $region37
    $region36: #{mymodel2_head.1} parent=1 // pred_region
      %67 = dma.done [#allocation7], 4096
    $region37: #{mymodel2_head.1} parent=1 // pred_fallthru
      _
    %p68 = scmp.eq.s32.totalorder 0, 0
    // Predicated region
    $region38: #{mymodel2_head.1} parent=1 // pred_check
      %p69 = pneg %p68
    $region39: #{mymodel2_head.1} parent=1 // pred_check_branch
      %71 = sbr.rel (%p69) target = $region41
    $region40: #{mymodel2_head.1} parent=1 // pred_region
      %72 = vst [vmem:[#allocation2] sm:$0xff] 0.0
      %73 = vst [vmem:[#allocation2 + $0x8] sm:$0xf] 0.0
    $region41: #{mymodel2_head.1} parent=1 // pred_fallthru
      _
    %v74 = vld [vmem:[%s1] sm:$0xff]
    %v75 = vld [vmem:[%s1 + $0x8] sm:$0xff]
    %v76 = vld [vmem:[#allocation3] sm:$0xff]
    %v77 = vld [vmem:[#allocation3 + $0x8] sm:$0xff]
    %v78 = vld [vmem:[#allocation3 + $0x10] sm:$0xff]
    %v79 = vld [vmem:[#allocation3 + $0x18] sm:$0xff]
    %v80 = vld [vmem:[#allocation3 + $0x20] sm:$0xff]
    %v81 = vld [vmem:[#allocation3 + $0x28] sm:$0xff]
    %v82 = vld [vmem:[#allocation3 + $0x30] sm:$0xff]
    %v83 = vld [vmem:[#allocation3 + $0x38] sm:$0xff]
    %v84 = vld [vmem:[#allocation3 + $0x40] sm:$0xff]
    %v85 = vld [vmem:[#allocation3 + $0x48] sm:$0xff]
    %v86 = vld [vmem:[#allocation3 + $0x50] sm:$0xff]
    %v87 = vld [vmem:[#allocation3 + $0x58] sm:$0xff]
    %vm88 = vcmp.ne.f32.partialorder %v74, 0.0
    %vm89 = vcmp.ne.f32.partialorder %v75, 0.0
    %91 = vset.pattern.permute.xlu0 0
    %92 = vperm.xlu0 %91, %v74
    %v93 = vpop.permute.xlu0 %92
    %96 = vset.pattern.permute.xlu0 0
    %97 = vperm.xlu0 %96, %v75
    %v98 = vpop.permute.xlu0 %97
    %v100 = vmul.f32 %v76, %v93
    %v101 = vmul.f32 %v77, %v93
    %v102 = vmul.f32 %v78, %v93
    %v103 = vmul.f32 %v79, %v93
    %v104 = vmul.f32 %v80, %v93
    %v105 = vmul.f32 %v81, %v93
    %v106 = vmul.f32 %v82, %v98
    %v107 = vmul.f32 %v83, %v98
    %v108 = vmul.f32 %v84, %v98
    %v109 = vmul.f32 %v85, %v98
    %v110 = vmul.f32 %v86, %v98
    %v111 = vmul.f32 %v87, %v98
    %v112 = vsel %vm88, 1, 0
    %v113 = vsel %vm89, 1, 0
    %114 = vset.pattern.permute.xlu0 0
    %115 = vperm.xlu0 %114, %v112
    %v116 = vpop.permute.xlu0 %115
    %117 = vset.pattern.permute.xlu0 0
    %118 = vperm.xlu0 %117, %v113
    %v119 = vpop.permute.xlu0 %118
    %vm120 = vcmp.eq.s32.totalorder %v116, 1
    %vm121 = vcmp.eq.s32.totalorder %v119, 1
    %v122 = vsel %vm120, %v100, 0.0
    %v123 = vsel %vm120, %v101, 0.0
    %v124 = vsel %vm120, %v102, 0.0
    %v125 = vsel %vm120, %v103, 0.0
    %v126 = vsel %vm120, %v104, 0.0
    %v127 = vsel %vm120, %v105, 0.0
    %v128 = vsel %vm121, %v106, 0.0
    %v129 = vsel %vm121, %v107, 0.0
    %v130 = vsel %vm121, %v108, 0.0
    %v131 = vsel %vm121, %v109, 0.0
    %v132 = vsel %vm121, %v110, 0.0
    %v133 = vsel %vm121, %v111, 0.0
    %v134 = vld [vmem:[#allocation2] sm:$0xff]
    %v135 = vld [vmem:[#allocation2 + $0x8] sm:$0xf]
    %v136 = vrot.slane %v122, 4
    %v137 = vadd.f32 %v122, %v136
    %v138 = vrot.slane %v137, 2
    %v139 = vadd.f32 %v137, %v138
    %v140 = vrot.slane %v139, 1
    %v141 = vadd.f32 %v139, %v140
    %v142 = vrot.slane %v123, 4
    %v143 = vadd.f32 %v123, %v142
    %v144 = vrot.slane %v143, 2
    %v145 = vadd.f32 %v143, %v144
    %v146 = vrot.slane %v145, 1
    %v147 = vadd.f32 %v145, %v146
    %v148 = vrot.slane %v124, 4
    %v149 = vadd.f32 %v124, %v148
    %v150 = vrot.slane %v149, 2
    %v151 = vadd.f32 %v149, %v150
    %v152 = vrot.slane %v151, 1
    %v153 = vadd.f32 %v151, %v152
    %v154 = vrot.slane %v125, 4
    %v155 = vadd.f32 %v125, %v154
    %v156 = vrot.slane %v155, 2
    %v157 = vadd.f32 %v155, %v156
    %v158 = vrot.slane %v157, 1
    %v159 = vadd.f32 %v157, %v158
    %v160 = vrot.slane %v126, 4
    %v161 = vadd.f32 %v126, %v160
    %v162 = vrot.slane %v161, 2
    %v163 = vadd.f32 %v161, %v162
    %v164 = vrot.slane %v163, 1
    %v165 = vadd.f32 %v163, %v164
    %v166 = vrot.slane %v127, 4
    %v167 = vadd.f32 %v127, %v166
    %v168 = vrot.slane %v167, 2
    %v169 = vadd.f32 %v167, %v168
    %v170 = vrot.slane %v169, 1
    %v171 = vadd.f32 %v169, %v170
    %v172 = vrot.slane %v128, 4
    %v173 = vadd.f32 %v128, %v172
    %v174 = vrot.slane %v173, 2
    %v175 = vadd.f32 %v173, %v174
    %v176 = vrot.slane %v175, 1
    %v177 = vadd.f32 %v175, %v176
    %v178 = vrot.slane %v129, 4
    %v179 = vadd.f32 %v129, %v178
    %v180 = vrot.slane %v179, 2
    %v181 = vadd.f32 %v179, %v180
    %v182 = vrot.slane %v181, 1
    %v183 = vadd.f32 %v181, %v182
    %v184 = vrot.slane %v130, 4
    %v185 = vadd.f32 %v130, %v184
    %v186 = vrot.slane %v185, 2
    %v187 = vadd.f32 %v185, %v186
    %v188 = vrot.slane %v187, 1
    %v189 = vadd.f32 %v187, %v188
    %v190 = vrot.slane %v131, 4
    %v191 = vadd.f32 %v131, %v190
    %v192 = vrot.slane %v191, 2
    %v193 = vadd.f32 %v191, %v192
    %v194 = vrot.slane %v193, 1
    %v195 = vadd.f32 %v193, %v194
    %v196 = vrot.slane %v132, 4
    %v197 = vadd.f32 %v132, %v196
    %v198 = vrot.slane %v197, 2
    %v199 = vadd.f32 %v197, %v198
    %v200 = vrot.slane %v199, 1
    %v201 = vadd.f32 %v199, %v200
    %v202 = vrot.slane %v133, 4
    %v203 = vadd.f32 %v133, %v202
    %v204 = vrot.slane %v203, 2
    %v205 = vadd.f32 %v203, %v204
    %v206 = vrot.slane %v205, 1
    %v207 = vadd.f32 %v205, %v206
    %v220 = vcombine.low %v141, %v147
    %v221 = vcombine.low %v153, %v159
    %v223 = vunpack.c.l.s4 1983009808
    %v224 = vunpack.c.0.s8 %v223
    %v225 = vlaneseq
    %v226 = vshrl.u32 %v225, 7
    %v227 = vsub.s32 %v224, %v226
    %v228 = vrot.slane %v220, %v227
    %v230 = vunpack.c.l.s4 1983009808
    %v231 = vunpack.c.0.s8 %v230
    %v232 = vlaneseq
    %v233 = vshrl.u32 %v232, 7
    %v234 = vsub.s32 %v231, %v233
    %v235 = vrot.slane %v221, %v234
    %v236 = vcombine.low %v228, %v235
    %v237 = vcombine.low %v165, %v171
    %v239 = vunpack.c.l.s4 1983009808
    %v240 = vunpack.c.0.s8 %v239
    %v241 = vlaneseq
    %v242 = vshrl.u32 %v241, 7
    %v243 = vsub.s32 %v240, %v242
    %v244 = vrot.slane %v237, %v243
    %v245 = vcombine.low %v177, %v183
    %v246 = vcombine.low %v189, %v195
    %v248 = vunpack.c.l.s4 1983009808
    %v249 = vunpack.c.0.s8 %v248
    %v250 = vlaneseq
    %v251 = vshrl.u32 %v250, 7
    %v252 = vsub.s32 %v249, %v251
    %v253 = vrot.slane %v245, %v252
    %v255 = vunpack.c.l.s4 1983009808
    %v256 = vunpack.c.0.s8 %v255
    %v257 = vlaneseq
    %v258 = vshrl.u32 %v257, 7
    %v259 = vsub.s32 %v256, %v258
    %v260 = vrot.slane %v246, %v259
    %v261 = vcombine.low %v253, %v260
    %v262 = vcombine.low %v201, %v207
    %v264 = vunpack.c.l.s4 1983009808
    %v265 = vunpack.c.0.s8 %v264
    %v266 = vlaneseq
    %v267 = vshrl.u32 %v266, 7
    %v268 = vsub.s32 %v265, %v267
    %v269 = vrot.slane %v262, %v268
    %vm270 = vcmask 1044484
    %v271 = vsel %vm270, %v236, %v236
    %vm272 = vcmask 1046534
    %v273 = vsel %vm272, %v236, %v271
    %v274 = vrot.slane %v261, 7
    %vm275 = vcmask 1041409
    %v276 = vsel %vm275, %v274, %v273
    %vm277 = vcmask 1043459
    %v278 = vsel %vm277, %v274, %v276
    %vm279 = vcmask 1045509
    %v280 = vsel %vm279, %v274, %v278
    %vm281 = vcmask 1047559
    %v282 = vsel %vm281, %v274, %v280
    %v283 = vsel %vm270, %v244, %v244
    %v284 = vsel %vm272, %v244, %v283
    %v285 = vrot.slane %v269, 7
    %v286 = vsel %vm275, %v285, %v284
    %v287 = vsel %vm277, %v285, %v286
    %v288 = vsel %vm279, %v285, %v287
    %v289 = vsel %vm281, %v285, %v288
    %v292 = vadd.f32 %v134, %v282
    %v293 = vadd.f32 %v135, %v289
    %294 = vst [vmem:[#allocation2] sm:$0xff] %v292
    %295 = vst [vmem:[#allocation2 + $0x8] sm:$0xf] %v293
    // Predicated region
    $region42: #{mymodel2_head.1} parent=1 // pred_check
      %p296 = pneg %p68
    $region43: #{mymodel2_head.1} parent=1 // pred_check_branch
      %298 = sbr.rel (%p296) target = $region45
    $region44: #{mymodel2_head.1} parent=1 // pred_region
      %v299 = vld [vmem:[#allocation2] sm:$0xff]
      %v300 = vld [vmem:[#allocation2 + $0x8] sm:$0xf]
      %v301 = vld [vmem:[#allocation6] sm:$0xff]
      %v302 = vld [vmem:[#allocation6 + $0x8] sm:$0xff]
      %v303 = vld [vmem:[#allocation6 + $0x10] sm:$0xff]
      %v304 = vld [vmem:[#allocation6 + $0x18] sm:$0xff]
      %v305 = vld [vmem:[#allocation6 + $0x20] sm:$0xff]
      %v306 = vld [vmem:[#allocation6 + $0x28] sm:$0xff]
      %v307 = vld [vmem:[#allocation6 + $0x30] sm:$0xff]
      %v308 = vld [vmem:[#allocation6 + $0x38] sm:$0xff]
      %v309 = vld [vmem:[#allocation6 + $0x40] sm:$0xff]
      %v310 = vld [vmem:[#allocation6 + $0x48] sm:$0xff]
      %v311 = vld [vmem:[#allocation6 + $0x50] sm:$0xff]
      %v312 = vld [vmem:[#allocation6 + $0x58] sm:$0xff]
      %v313 = vld [vmem:[#allocation6 + $0x60] sm:$0xff]
      %v314 = vld [vmem:[#allocation6 + $0x68] sm:$0xff]
      %v315 = vld [vmem:[#allocation6 + $0x70] sm:$0xff]
      %v316 = vld [vmem:[#allocation6 + $0x78] sm:$0xff]
      %v317 = vld [vmem:[#allocation6 + $0x80] sm:$0xff]
      %v318 = vld [vmem:[#allocation6 + $0x88] sm:$0xff]
      %v319 = vld [vmem:[#allocation6 + $0x90] sm:$0xff]
      %v320 = vld [vmem:[#allocation6 + $0x98] sm:$0xff]
      %v321 = vld [vmem:[#allocation6 + $0xa0] sm:$0xff]
      %v322 = vld [vmem:[#allocation6 + $0xa8] sm:$0xff]
      %v323 = vld [vmem:[#allocation6 + $0xb0] sm:$0xff]
      %v324 = vld [vmem:[#allocation6 + $0xb8] sm:$0xff]
      %v325 = vld [vmem:[#allocation6 + $0xc0] sm:$0xff]
      %v326 = vld [vmem:[#allocation6 + $0xc8] sm:$0xff]
      %v327 = vld [vmem:[#allocation6 + $0xd0] sm:$0xff]
      %v328 = vld [vmem:[#allocation6 + $0xd8] sm:$0xff]
      %v329 = vld [vmem:[#allocation6 + $0xe0] sm:$0xff]
      %v330 = vld [vmem:[#allocation6 + $0xe8] sm:$0xff]
      %v331 = vld [vmem:[#allocation6 + $0xf0] sm:$0xff]
      %v332 = vld [vmem:[#allocation6 + $0xf8] sm:$0xff]
      %v333 = vld [vmem:[#allocation6 + $0x100] sm:$0xff]
      %v334 = vld [vmem:[#allocation6 + $0x108] sm:$0xff]
      %v335 = vld [vmem:[#allocation6 + $0x110] sm:$0xff]
      %v336 = vld [vmem:[#allocation6 + $0x118] sm:$0xff]
      %v337 = vld [vmem:[#allocation6 + $0x120] sm:$0xff]
      %v338 = vld [vmem:[#allocation6 + $0x128] sm:$0xff]
      %v339 = vld [vmem:[#allocation6 + $0x130] sm:$0xff]
      %v340 = vld [vmem:[#allocation6 + $0x138] sm:$0xff]
      %v341 = vld [vmem:[#allocation6 + $0x140] sm:$0xff]
      %v342 = vld [vmem:[#allocation6 + $0x148] sm:$0xff]
      %v343 = vld [vmem:[#allocation6 + $0x150] sm:$0xff]
      %v344 = vld [vmem:[#allocation6 + $0x158] sm:$0xff]
      %v345 = vld [vmem:[#allocation6 + $0x160] sm:$0xff]
      %v346 = vld [vmem:[#allocation6 + $0x168] sm:$0xff]
      %v347 = vld [vmem:[#allocation6 + $0x170] sm:$0xff]
      %v348 = vld [vmem:[#allocation6 + $0x178] sm:$0xff]
      %v349 = vld [vmem:[#allocation6 + $0x180] sm:$0xff]
      %v350 = vld [vmem:[#allocation6 + $0x188] sm:$0xff]
      %v351 = vld [vmem:[#allocation6 + $0x190] sm:$0xff]
      %v352 = vld [vmem:[#allocation6 + $0x198] sm:$0xff]
      %v353 = vld [vmem:[#allocation6 + $0x1a0] sm:$0xff]
      %v354 = vld [vmem:[#allocation6 + $0x1a8] sm:$0xff]
      %v355 = vld [vmem:[#allocation6 + $0x1b0] sm:$0xff]
      %v356 = vld [vmem:[#allocation6 + $0x1b8] sm:$0xff]
      %v357 = vld [vmem:[#allocation6 + $0x1c0] sm:$0xff]
      %v358 = vld [vmem:[#allocation6 + $0x1c8] sm:$0xff]
      %v359 = vld [vmem:[#allocation6 + $0x1d0] sm:$0xff]
      %v360 = vld [vmem:[#allocation6 + $0x1d8] sm:$0xff]
      %v361 = vld [vmem:[#allocation6 + $0x1e0] sm:$0xff]
      %v362 = vld [vmem:[#allocation6 + $0x1e8] sm:$0xff]
      %v363 = vld [vmem:[#allocation6 + $0x1f0] sm:$0xff]
      %v364 = vld [vmem:[#allocation6 + $0x1f8] sm:$0xff]
      %v365 = vld [vmem:[#allocation6 + $0x200] sm:$0xff]
      %v366 = vld [vmem:[#allocation6 + $0x208] sm:$0xff]
      %v367 = vld [vmem:[#allocation6 + $0x210] sm:$0xff]
      %v368 = vld [vmem:[#allocation6 + $0x218] sm:$0xff]
      %v369 = vld [vmem:[#allocation6 + $0x220] sm:$0xff]
      %v370 = vld [vmem:[#allocation6 + $0x228] sm:$0xff]
      %v371 = vld [vmem:[#allocation6 + $0x230] sm:$0xff]
      %v372 = vld [vmem:[#allocation6 + $0x238] sm:$0xff]
      %v373 = vld [vmem:[#allocation6 + $0x240] sm:$0xff]
      %v374 = vld [vmem:[#allocation6 + $0x248] sm:$0xff]
      %v375 = vld [vmem:[#allocation6 + $0x250] sm:$0xff]
      %v376 = vld [vmem:[#allocation6 + $0x258] sm:$0xff]
      %v377 = vld [vmem:[#allocation6 + $0x260] sm:$0xff]
      %v378 = vld [vmem:[#allocation6 + $0x268] sm:$0xff]
      %v379 = vld [vmem:[#allocation6 + $0x270] sm:$0xff]
      %v380 = vld [vmem:[#allocation6 + $0x278] sm:$0xff]
      %v381 = vld [vmem:[#allocation6 + $0x280] sm:$0xff]
      %v382 = vld [vmem:[#allocation6 + $0x288] sm:$0xff]
      %v383 = vld [vmem:[#allocation6 + $0x290] sm:$0xff]
      %v384 = vld [vmem:[#allocation6 + $0x298] sm:$0xff]
      %v385 = vld [vmem:[#allocation6 + $0x2a0] sm:$0xff]
      %v386 = vld [vmem:[#allocation6 + $0x2a8] sm:$0xff]
      %v387 = vld [vmem:[#allocation6 + $0x2b0] sm:$0xff]
      %v388 = vld [vmem:[#allocation6 + $0x2b8] sm:$0xff]
      %v389 = vld [vmem:[#allocation6 + $0x2c0] sm:$0xff]
      %v390 = vld [vmem:[#allocation6 + $0x2c8] sm:$0xff]
      %v391 = vld [vmem:[#allocation6 + $0x2d0] sm:$0xff]
      %v392 = vld [vmem:[#allocation6 + $0x2d8] sm:$0xff]
      %v393 = vld [vmem:[#allocation6 + $0x2e0] sm:$0xff]
      %v394 = vld [vmem:[#allocation6 + $0x2e8] sm:$0xff]
      %v395 = vld [vmem:[#allocation6 + $0x2f0] sm:$0xff]
      %v396 = vld [vmem:[#allocation6 + $0x2f8] sm:$0xff]
      %v397 = vld [vmem:[#allocation6 + $0x300] sm:$0xff]
      %v398 = vld [vmem:[#allocation6 + $0x308] sm:$0xff]
      %v399 = vld [vmem:[#allocation6 + $0x310] sm:$0xff]
      %v400 = vld [vmem:[#allocation6 + $0x318] sm:$0xff]
      %v401 = vld [vmem:[#allocation6 + $0x320] sm:$0xff]
      %v402 = vld [vmem:[#allocation6 + $0x328] sm:$0xff]
      %v403 = vld [vmem:[#allocation6 + $0x330] sm:$0xff]
      %v404 = vld [vmem:[#allocation6 + $0x338] sm:$0xff]
      %v405 = vld [vmem:[#allocation6 + $0x340] sm:$0xff]
      %v406 = vld [vmem:[#allocation6 + $0x348] sm:$0xff]
      %v407 = vld [vmem:[#allocation6 + $0x350] sm:$0xff]
      %v408 = vld [vmem:[#allocation6 + $0x358] sm:$0xff]
      %v409 = vld [vmem:[#allocation6 + $0x360] sm:$0xff]
      %v410 = vld [vmem:[#allocation6 + $0x368] sm:$0xff]
      %v411 = vld [vmem:[#allocation6 + $0x370] sm:$0xff]
      %v412 = vld [vmem:[#allocation6 + $0x378] sm:$0xff]
      %v413 = vld [vmem:[#allocation6 + $0x380] sm:$0xff]
      %v414 = vld [vmem:[#allocation6 + $0x388] sm:$0xff]
      %v415 = vld [vmem:[#allocation6 + $0x390] sm:$0xff]
      %v416 = vld [vmem:[#allocation6 + $0x398] sm:$0xff]
      %v417 = vld [vmem:[#allocation6 + $0x3a0] sm:$0xff]
      %v418 = vld [vmem:[#allocation6 + $0x3a8] sm:$0xff]
      %v419 = vld [vmem:[#allocation6 + $0x3b0] sm:$0xff]
      %v420 = vld [vmem:[#allocation6 + $0x3b8] sm:$0xff]
      %v421 = vld [vmem:[#allocation6 + $0x3c0] sm:$0xff]
      %v422 = vld [vmem:[#allocation6 + $0x3c8] sm:$0xff]
      %v423 = vld [vmem:[#allocation6 + $0x3d0] sm:$0xff]
      %v424 = vld [vmem:[#allocation6 + $0x3d8] sm:$0xff]
      %v425 = vld [vmem:[#allocation6 + $0x3e0] sm:$0xff]
      %v426 = vld [vmem:[#allocation6 + $0x3e8] sm:$0xff]
      %v427 = vld [vmem:[#allocation6 + $0x3f0] sm:$0xff]
      %v428 = vld [vmem:[#allocation6 + $0x3f8] sm:$0xff]
      %v429 = vld [vmem:[#allocation6 + $0x400] sm:$0xff]
      %v430 = vld [vmem:[#allocation6 + $0x408] sm:$0xff]
      %v431 = vld [vmem:[#allocation6 + $0x410] sm:$0xff]
      %v432 = vld [vmem:[#allocation6 + $0x418] sm:$0xff]
      %v433 = vld [vmem:[#allocation6 + $0x420] sm:$0xff]
      %v434 = vld [vmem:[#allocation6 + $0x428] sm:$0xff]
      %v435 = vld [vmem:[#allocation6 + $0x430] sm:$0xff]
      %v436 = vld [vmem:[#allocation6 + $0x438] sm:$0xff]
      %v437 = vld [vmem:[#allocation6 + $0x440] sm:$0xff]
      %v438 = vld [vmem:[#allocation6 + $0x448] sm:$0xff]
      %v439 = vld [vmem:[#allocation6 + $0x450] sm:$0xff]
      %v440 = vld [vmem:[#allocation6 + $0x458] sm:$0xff]
      %v441 = vld [vmem:[#allocation6 + $0x460] sm:$0xff]
      %v442 = vld [vmem:[#allocation6 + $0x468] sm:$0xff]
      %v443 = vld [vmem:[#allocation6 + $0x470] sm:$0xff]
      %v444 = vld [vmem:[#allocation6 + $0x478] sm:$0xff]
      %v445 = vld [vmem:[#allocation6 + $0x480] sm:$0xff]
      %v446 = vld [vmem:[#allocation6 + $0x488] sm:$0xff]
      %v447 = vld [vmem:[#allocation6 + $0x490] sm:$0xff]
      %v448 = vld [vmem:[#allocation6 + $0x498] sm:$0xff]
      %v449 = vld [vmem:[#allocation6 + $0x4a0] sm:$0xff]
      %v450 = vld [vmem:[#allocation6 + $0x4a8] sm:$0xff]
      %v451 = vld [vmem:[#allocation6 + $0x4b0] sm:$0xff]
      %v452 = vld [vmem:[#allocation6 + $0x4b8] sm:$0xff]
      %v453 = vld [vmem:[#allocation6 + $0x4c0] sm:$0xff]
      %v454 = vld [vmem:[#allocation6 + $0x4c8] sm:$0xff]
      %v455 = vld [vmem:[#allocation6 + $0x4d0] sm:$0xff]
      %v456 = vld [vmem:[#allocation6 + $0x4d8] sm:$0xff]
      %v457 = vld [vmem:[#allocation6 + $0x4e0] sm:$0xff]
      %v458 = vld [vmem:[#allocation6 + $0x4e8] sm:$0xff]
      %v459 = vld [vmem:[#allocation6 + $0x4f0] sm:$0xff]
      %v460 = vld [vmem:[#allocation6 + $0x4f8] sm:$0xff]
      %v461 = vld [vmem:[#allocation6 + $0x500] sm:$0xff]
      %v462 = vld [vmem:[#allocation6 + $0x508] sm:$0xff]
      %v463 = vld [vmem:[#allocation6 + $0x510] sm:$0xff]
      %v464 = vld [vmem:[#allocation6 + $0x518] sm:$0xff]
      %v465 = vld [vmem:[#allocation6 + $0x520] sm:$0xff]
      %v466 = vld [vmem:[#allocation6 + $0x528] sm:$0xff]
      %v467 = vld [vmem:[#allocation6 + $0x530] sm:$0xff]
      %v468 = vld [vmem:[#allocation6 + $0x538] sm:$0xff]
      %v469 = vld [vmem:[#allocation6 + $0x540] sm:$0xff]
      %v470 = vld [vmem:[#allocation6 + $0x548] sm:$0xff]
      %v471 = vld [vmem:[#allocation6 + $0x550] sm:$0xff]
      %v472 = vld [vmem:[#allocation6 + $0x558] sm:$0xff]
      %v473 = vld [vmem:[#allocation6 + $0x560] sm:$0xff]
      %v474 = vld [vmem:[#allocation6 + $0x568] sm:$0xff]
      %v475 = vld [vmem:[#allocation6 + $0x570] sm:$0xff]
      %v476 = vld [vmem:[#allocation6 + $0x578] sm:$0xff]
      %v477 = vld [vmem:[#allocation6 + $0x580] sm:$0xff]
      %v478 = vld [vmem:[#allocation6 + $0x588] sm:$0xff]
      %v479 = vld [vmem:[#allocation6 + $0x590] sm:$0xff]
      %v480 = vld [vmem:[#allocation6 + $0x598] sm:$0xff]
      %v481 = vld [vmem:[#allocation6 + $0x5a0] sm:$0xff]
      %v482 = vld [vmem:[#allocation6 + $0x5a8] sm:$0xff]
      %v483 = vld [vmem:[#allocation6 + $0x5b0] sm:$0xff]
      %v484 = vld [vmem:[#allocation6 + $0x5b8] sm:$0xff]
      %v485 = vld [vmem:[#allocation6 + $0x5c0] sm:$0xff]
      %v486 = vld [vmem:[#allocation6 + $0x5c8] sm:$0xff]
      %v487 = vld [vmem:[#allocation6 + $0x5d0] sm:$0xff]
      %v488 = vld [vmem:[#allocation6 + $0x5d8] sm:$0xff]
      %v489 = vld [vmem:[#allocation6 + $0x5e0] sm:$0xff]
      %v490 = vld [vmem:[#allocation6 + $0x5e8] sm:$0xff]
      %v491 = vld [vmem:[#allocation6 + $0x5f0] sm:$0xff]
      %v492 = vld [vmem:[#allocation6 + $0x5f8] sm:$0xff]
      %v493 = vld [vmem:[%s3] sm:$0x3]
      %v495 = vlaneseq
      %v496 = vshrl.u32 %v495, 7
      %v497 = vsub.s32 0, %v496
      %v498 = vrot.slane %v493, %v497
      %v499 = vlaneseq
      %v500 = vshrl.u32 %v499, 7
      %v501 = vsub.s32 1, %v500
      %v502 = vrot.slane %v493, %v501
      %v507 = vcombine.high %v299, %v299
      %v509 = vunpack.c.l.s4 1983009808
      %v510 = vunpack.c.0.s8 %v509
      %v511 = vlaneseq
      %v512 = vshrl.u32 %v511, 7
      %v513 = vsub.s32 %v510, %v512
      %v514 = vrot.slane %v299, %v513
      %v516 = vunpack.c.l.s4 1983009808
      %v517 = vunpack.c.0.s8 %v516
      %v518 = vlaneseq
      %v519 = vshrl.u32 %v518, 7
      %v520 = vsub.s32 %v517, %v519
      %v521 = vrot.slane %v507, %v520
      %v522 = vcombine.high %v514, %v514
      %v523 = vcombine.high %v521, %v521
      %v525 = vunpack.c.l.s4 1983009808
      %v526 = vunpack.c.0.s8 %v525
      %v527 = vlaneseq
      %v528 = vshrl.u32 %v527, 7
      %v529 = vsub.s32 %v526, %v528
      %v530 = vrot.slane %v300, %v529
      %v531 = vcombine.high %v530, %v530
      %538 = vmatprep.subr.mxu0 %v332
      %539 = vmatpush1.msra.mxu0 %v331
      %540 = vmatprep.subr.mxu0 %v330
      %541 = vmatpush1.msra.mxu0 %v329
      %542 = vmatprep.subr.mxu0 %v328
      %543 = vmatpush1.msra.mxu0 %v327
      %544 = vmatprep.subr.mxu0 %v326
      %545 = vmatpush1.msra.mxu0 %v325
      %546 = vmatprep.subr.mxu0 %v324
      %547 = vmatpush1.msra.mxu0 %v323
      %548 = vmatprep.subr.mxu0 %v322
      %549 = vmatpush1.msra.mxu0 %v321
      %550 = vmatprep.subr.mxu0 %v320
      %551 = vmatpush1.msra.mxu0 %v319
      %552 = vmatprep.subr.mxu0 %v318
      %553 = vmatpush1.msra.mxu0 %v317
      %554 = vmatprep.subr.mxu0 %v316
      %555 = vmatpush1.msra.mxu0 %v315
      %556 = vmatprep.subr.mxu0 %v314
      %557 = vmatpush1.msra.mxu0 %v313
      %558 = vmatprep.subr.mxu0 %v312
      %559 = vmatpush1.msra.mxu0 %v311
      %560 = vmatprep.subr.mxu0 %v310
      %561 = vmatpush1.msra.mxu0 %v309
      %562 = vmatprep.subr.mxu0 %v308
      %563 = vmatpush1.msra.mxu0 %v307
      %564 = vmatprep.subr.mxu0 %v306
      %565 = vmatpush1.msra.mxu0 %v305
      %566 = vmatprep.subr.mxu0 %v304
      %567 = vmatpush1.msra.mxu0 %v303
      %568 = vmatprep.subr.mxu0 %v302
      %569 = vmatpush1.msra.mxu0 %v301
      %570 = vmatprep.subr.mxu0 %v364
      %571 = vmatpush2.msra.mxu0 %v363
      %572 = vmatprep.subr.mxu0 %v362
      %573 = vmatpush2.msra.mxu0 %v361
      %574 = vmatprep.subr.mxu0 %v360
      %575 = vmatpush2.msra.mxu0 %v359
      %576 = vmatprep.subr.mxu0 %v358
      %577 = vmatpush2.msra.mxu0 %v357
      %578 = vmatprep.subr.mxu0 %v356
      %579 = vmatpush2.msra.mxu0 %v355
      %580 = vmatprep.subr.mxu0 %v354
      %581 = vmatpush2.msra.mxu0 %v353
      %582 = vmatprep.subr.mxu0 %v352
      %583 = vmatpush2.msra.mxu0 %v351
      %584 = vmatprep.subr.mxu0 %v350
      %585 = vmatpush2.msra.mxu0 %v349
      %586 = vmatprep.subr.mxu0 %v348
      %587 = vmatpush2.msra.mxu0 %v347
      %588 = vmatprep.subr.mxu0 %v346
      %589 = vmatpush2.msra.mxu0 %v345
      %590 = vmatprep.subr.mxu0 %v344
      %591 = vmatpush2.msra.mxu0 %v343
      %592 = vmatprep.subr.mxu0 %v342
      %593 = vmatpush2.msra.mxu0 %v341
      %594 = vmatprep.subr.mxu0 %v340
      %595 = vmatpush2.msra.mxu0 %v339
      %596 = vmatprep.subr.mxu0 %v338
      %597 = vmatpush2.msra.mxu0 %v337
      %598 = vmatprep.subr.mxu0 %v336
      %599 = vmatpush2.msra.mxu0 %v335
      %600 = vmatprep.subr.mxu0 %v334
      %601 = vmatpush2.msra.mxu0 %v333
      %602 = vmatprep.mubr.f32.mxu0 %v522
      %603 = vmatmul.mubr.f32.gmra.mxu0 %v514
      %v604 = vpop.f32.mrf.mxu0
      %v605 = vadd.f32 %v498, %v604
      %v606 = vpop.f32.mrf.mxu0
      %v607 = vadd.f32 %v502, %v606
      %608 = vdwg.mxu0
      %609 = vmatprep.subr.mxu0 %v396
      %610 = vmatpush1.msra.mxu0 %v395
      %611 = vmatprep.subr.mxu0 %v394
      %612 = vmatpush1.msra.mxu0 %v393
      %613 = vmatprep.subr.mxu0 %v392
      %614 = vmatpush1.msra.mxu0 %v391
      %615 = vmatprep.subr.mxu0 %v390
      %616 = vmatpush1.msra.mxu0 %v389
      %617 = vmatprep.subr.mxu0 %v388
      %618 = vmatpush1.msra.mxu0 %v387
      %619 = vmatprep.subr.mxu0 %v386
      %620 = vmatpush1.msra.mxu0 %v385
      %621 = vmatprep.subr.mxu0 %v384
      %622 = vmatpush1.msra.mxu0 %v383
      %623 = vmatprep.subr.mxu0 %v382
      %624 = vmatpush1.msra.mxu0 %v381
      %625 = vmatprep.subr.mxu0 %v380
      %626 = vmatpush1.msra.mxu0 %v379
      %627 = vmatprep.subr.mxu0 %v378
      %628 = vmatpush1.msra.mxu0 %v377
      %629 = vmatprep.subr.mxu0 %v376
      %630 = vmatpush1.msra.mxu0 %v375
      %631 = vmatprep.subr.mxu0 %v374
      %632 = vmatpush1.msra.mxu0 %v373
      %633 = vmatprep.subr.mxu0 %v372
      %634 = vmatpush1.msra.mxu0 %v371
      %635 = vmatprep.subr.mxu0 %v370
      %636 = vmatpush1.msra.mxu0 %v369
      %637 = vmatprep.subr.mxu0 %v368
      %638 = vmatpush1.msra.mxu0 %v367
      %639 = vmatprep.subr.mxu0 %v366
      %640 = vmatpush1.msra.mxu0 %v365
      %641 = vmatprep.subr.mxu0 %v428
      %642 = vmatpush2.msra.mxu0 %v427
      %643 = vmatprep.subr.mxu0 %v426
      %644 = vmatpush2.msra.mxu0 %v425
      %645 = vmatprep.subr.mxu0 %v424
      %646 = vmatpush2.msra.mxu0 %v423
      %647 = vmatprep.subr.mxu0 %v422
      %648 = vmatpush2.msra.mxu0 %v421
      %649 = vmatprep.subr.mxu0 %v420
      %650 = vmatpush2.msra.mxu0 %v419
      %651 = vmatprep.subr.mxu0 %v418
      %652 = vmatpush2.msra.mxu0 %v417
      %653 = vmatprep.subr.mxu0 %v416
      %654 = vmatpush2.msra.mxu0 %v415
      %655 = vmatprep.subr.mxu0 %v414
      %656 = vmatpush2.msra.mxu0 %v413
      %657 = vmatprep.subr.mxu0 %v412
      %658 = vmatpush2.msra.mxu0 %v411
      %659 = vmatprep.subr.mxu0 %v410
      %660 = vmatpush2.msra.mxu0 %v409
      %661 = vmatprep.subr.mxu0 %v408
      %662 = vmatpush2.msra.mxu0 %v407
      %663 = vmatprep.subr.mxu0 %v406
      %664 = vmatpush2.msra.mxu0 %v405
      %665 = vmatprep.subr.mxu0 %v404
      %666 = vmatpush2.msra.mxu0 %v403
      %667 = vmatprep.subr.mxu0 %v402
      %668 = vmatpush2.msra.mxu0 %v401
      %669 = vmatprep.subr.mxu0 %v400
      %670 = vmatpush2.msra.mxu0 %v399
      %671 = vmatprep.subr.mxu0 %v398
      %672 = vmatpush2.msra.mxu0 %v397
      %673 = vmatprep.mubr.f32.mxu0 %v523
      %674 = vmatmul.mubr.f32.gmra.mxu0 %v521
      %v675 = vpop.f32.mrf.mxu0
      %v676 = vadd.f32 %v605, %v675
      %v677 = vpop.f32.mrf.mxu0
      %v678 = vadd.f32 %v607, %v677
      %679 = vdwg.mxu0
      %680 = vmatprep.subr.mxu0 %v460
      %681 = vmatpush1.msra.mxu0 %v459
      %682 = vmatprep.subr.mxu0 %v458
      %683 = vmatpush1.msra.mxu0 %v457
      %684 = vmatprep.subr.mxu0 %v456
      %685 = vmatpush1.msra.mxu0 %v455
      %686 = vmatprep.subr.mxu0 %v454
      %687 = vmatpush1.msra.mxu0 %v453
      %688 = vmatprep.subr.mxu0 %v452
      %689 = vmatpush1.msra.mxu0 %v451
      %690 = vmatprep.subr.mxu0 %v450
      %691 = vmatpush1.msra.mxu0 %v449
      %692 = vmatprep.subr.mxu0 %v448
      %693 = vmatpush1.msra.mxu0 %v447
      %694 = vmatprep.subr.mxu0 %v446
      %695 = vmatpush1.msra.mxu0 %v445
      %696 = vmatprep.subr.mxu0 %v444
      %697 = vmatpush1.msra.mxu0 %v443
      %698 = vmatprep.subr.mxu0 %v442
      %699 = vmatpush1.msra.mxu0 %v441
      %700 = vmatprep.subr.mxu0 %v440
      %701 = vmatpush1.msra.mxu0 %v439
      %702 = vmatprep.subr.mxu0 %v438
      %703 = vmatpush1.msra.mxu0 %v437
      %704 = vmatprep.subr.mxu0 %v436
      %705 = vmatpush1.msra.mxu0 %v435
      %706 = vmatprep.subr.mxu0 %v434
      %707 = vmatpush1.msra.mxu0 %v433
      %708 = vmatprep.subr.mxu0 %v432
      %709 = vmatpush1.msra.mxu0 %v431
      %710 = vmatprep.subr.mxu0 %v430
      %711 = vmatpush1.msra.mxu0 %v429
      %712 = vmatprep.subr.mxu0 %v492
      %713 = vmatpush2.msra.mxu0 %v491
      %714 = vmatprep.subr.mxu0 %v490
      %715 = vmatpush2.msra.mxu0 %v489
      %716 = vmatprep.subr.mxu0 %v488
      %717 = vmatpush2.msra.mxu0 %v487
      %718 = vmatprep.subr.mxu0 %v486
      %719 = vmatpush2.msra.mxu0 %v485
      %720 = vmatprep.subr.mxu0 %v484
      %721 = vmatpush2.msra.mxu0 %v483
      %722 = vmatprep.subr.mxu0 %v482
      %723 = vmatpush2.msra.mxu0 %v481
      %724 = vmatprep.subr.mxu0 %v480
      %725 = vmatpush2.msra.mxu0 %v479
      %726 = vmatprep.subr.mxu0 %v478
      %727 = vmatpush2.msra.mxu0 %v477
      %728 = vmatprep.subr.mxu0 %v476
      %729 = vmatpush2.msra.mxu0 %v475
      %730 = vmatprep.subr.mxu0 %v474
      %731 = vmatpush2.msra.mxu0 %v473
      %732 = vmatprep.subr.mxu0 %v472
      %733 = vmatpush2.msra.mxu0 %v471
      %734 = vmatprep.subr.mxu0 %v470
      %735 = vmatpush2.msra.mxu0 %v469
      %736 = vmatprep.subr.mxu0 %v468
      %737 = vmatpush2.msra.mxu0 %v467
      %738 = vmatprep.subr.mxu0 %v466
      %739 = vmatpush2.msra.mxu0 %v465
      %740 = vmatprep.subr.mxu0 %v464
      %741 = vmatpush2.msra.mxu0 %v463
      %742 = vmatprep.subr.mxu0 %v462
      %743 = vmatpush2.msra.mxu0 %v461
      %744 = vmatprep.mubr.f32.mxu0 %v531
      %745 = vmatmul.mubr.f32.gmra.mxu0 %v530
      %v746 = vpop.f32.mrf.mxu0
      %v747 = vadd.f32 %v676, %v746
      %v748 = vpop.f32.mrf.mxu0
      %v749 = vadd.f32 %v678, %v748
      %750 = vdwg.mxu0
      %v753 = vcombine.low %v747, %v749
      %v755 = vunpack.c.l.s4 1983009808
      %v756 = vunpack.c.0.s8 %v755
      %v757 = vlaneseq
      %v758 = vshrl.u32 %v757, 7
      %v759 = vsub.s32 %v756, %v758
      %v760 = vrot.slane %v753, %v759
      %762 = vst [vmem:[#allocation10] sm:$0xf] %v760
      %v763 = vmax.f32 %v747, 0.0
      %v764 = vmax.f32 %v749, 0.0
      %v765 = vld [vmem:[#allocation8] sm:$0xff]
      %v766 = vld [vmem:[#allocation8 + $0x8] sm:$0xff]
      %v767 = vld [vmem:[#allocation8 + $0x10] sm:$0xff]
      %v768 = vld [vmem:[#allocation8 + $0x18] sm:$0xff]
      %v769 = vld [vmem:[#allocation8 + $0x20] sm:$0xff]
      %v770 = vld [vmem:[#allocation8 + $0x28] sm:$0xff]
      %v771 = vld [vmem:[#allocation8 + $0x30] sm:$0xff]
      %v772 = vld [vmem:[#allocation8 + $0x38] sm:$0xff]
      %v773 = vld [vmem:[#allocation8 + $0x40] sm:$0xff]
      %v774 = vld [vmem:[#allocation8 + $0x48] sm:$0xff]
      %v775 = vld [vmem:[#allocation8 + $0x50] sm:$0xff]
      %v776 = vld [vmem:[#allocation8 + $0x58] sm:$0xff]
      %v777 = vld [vmem:[#allocation8 + $0x60] sm:$0xff]
      %v778 = vld [vmem:[#allocation8 + $0x68] sm:$0xff]
      %v779 = vld [vmem:[#allocation8 + $0x70] sm:$0xff]
      %v780 = vld [vmem:[#allocation8 + $0x78] sm:$0xff]
      %v781 = vld [vmem:[#allocation8 + $0x80] sm:$0xff]
      %v782 = vld [vmem:[#allocation8 + $0x88] sm:$0xff]
      %v783 = vld [vmem:[#allocation8 + $0x90] sm:$0xff]
      %v784 = vld [vmem:[#allocation8 + $0x98] sm:$0xff]
      %v785 = vld [vmem:[#allocation8 + $0xa0] sm:$0xff]
      %v786 = vld [vmem:[#allocation8 + $0xa8] sm:$0xff]
      %v787 = vld [vmem:[#allocation8 + $0xb0] sm:$0xff]
      %v788 = vld [vmem:[#allocation8 + $0xb8] sm:$0xff]
      %v789 = vld [vmem:[#allocation8 + $0xc0] sm:$0xff]
      %v790 = vld [vmem:[#allocation8 + $0xc8] sm:$0xff]
      %v791 = vld [vmem:[#allocation8 + $0xd0] sm:$0xff]
      %v792 = vld [vmem:[#allocation8 + $0xd8] sm:$0xff]
      %v793 = vld [vmem:[#allocation8 + $0xe0] sm:$0xff]
      %v794 = vld [vmem:[#allocation8 + $0xe8] sm:$0xff]
      %v795 = vld [vmem:[#allocation8 + $0xf0] sm:$0xff]
      %v796 = vld [vmem:[#allocation8 + $0xf8] sm:$0xff]
      %v797 = vld [vmem:[%s5] sm:$0x1]
      %v799 = vlaneseq
      %v800 = vshrl.u32 %v799, 7
      %v801 = vsub.s32 0, %v800
      %v802 = vrot.slane %v797, %v801
      %804 = vmatprep.subr.mxu0 0.0
      %805 = vmatpush1.msra.mxu0 %v780
      %806 = vmatprep.subr.mxu0 0.0
      %807 = vmatpush1.msra.mxu0 %v779
      %808 = vmatprep.subr.mxu0 0.0
      %809 = vmatpush1.msra.mxu0 %v778
      %810 = vmatprep.subr.mxu0 0.0
      %811 = vmatpush1.msra.mxu0 %v777
      %812 = vmatprep.subr.mxu0 0.0
      %813 = vmatpush1.msra.mxu0 %v776
      %814 = vmatprep.subr.mxu0 0.0
      %815 = vmatpush1.msra.mxu0 %v775
      %816 = vmatprep.subr.mxu0 0.0
      %817 = vmatpush1.msra.mxu0 %v774
      %818 = vmatprep.subr.mxu0 0.0
      %819 = vmatpush1.msra.mxu0 %v773
      %820 = vmatprep.subr.mxu0 0.0
      %821 = vmatpush1.msra.mxu0 %v772
      %822 = vmatprep.subr.mxu0 0.0
      %823 = vmatpush1.msra.mxu0 %v771
      %824 = vmatprep.subr.mxu0 0.0
      %825 = vmatpush1.msra.mxu0 %v770
      %826 = vmatprep.subr.mxu0 0.0
      %827 = vmatpush1.msra.mxu0 %v769
      %828 = vmatprep.subr.mxu0 0.0
      %829 = vmatpush1.msra.mxu0 %v768
      %830 = vmatprep.subr.mxu0 0.0
      %831 = vmatpush1.msra.mxu0 %v767
      %832 = vmatprep.subr.mxu0 0.0
      %833 = vmatpush1.msra.mxu0 %v766
      %834 = vmatprep.subr.mxu0 0.0
      %835 = vmatpush1.msra.mxu0 %v765
      %836 = vmatprep.subr.mxu0 0.0
      %837 = vmatpush2.msra.mxu0 %v796
      %838 = vmatprep.subr.mxu0 0.0
      %839 = vmatpush2.msra.mxu0 %v795
      %840 = vmatprep.subr.mxu0 0.0
      %841 = vmatpush2.msra.mxu0 %v794
      %842 = vmatprep.subr.mxu0 0.0
      %843 = vmatpush2.msra.mxu0 %v793
      %844 = vmatprep.subr.mxu0 0.0
      %845 = vmatpush2.msra.mxu0 %v792
      %846 = vmatprep.subr.mxu0 0.0
      %847 = vmatpush2.msra.mxu0 %v791
      %848 = vmatprep.subr.mxu0 0.0
      %849 = vmatpush2.msra.mxu0 %v790
      %850 = vmatprep.subr.mxu0 0.0
      %851 = vmatpush2.msra.mxu0 %v789
      %852 = vmatprep.subr.mxu0 0.0
      %853 = vmatpush2.msra.mxu0 %v788
      %854 = vmatprep.subr.mxu0 0.0
      %855 = vmatpush2.msra.mxu0 %v787
      %856 = vmatprep.subr.mxu0 0.0
      %857 = vmatpush2.msra.mxu0 %v786
      %858 = vmatprep.subr.mxu0 0.0
      %859 = vmatpush2.msra.mxu0 %v785
      %860 = vmatprep.subr.mxu0 0.0
      %861 = vmatpush2.msra.mxu0 %v784
      %862 = vmatprep.subr.mxu0 0.0
      %863 = vmatpush2.msra.mxu0 %v783
      %864 = vmatprep.subr.mxu0 0.0
      %865 = vmatpush2.msra.mxu0 %v782
      %866 = vmatprep.subr.mxu0 0.0
      %867 = vmatpush2.msra.mxu0 %v781
      %868 = vmatprep.mubr.f32.mxu0 %v764
      %869 = vmatmul.mubr.f32.gmra.mxu0 %v763
      %v870 = vpop.f32.mrf.mxu0
      %v871 = vadd.f32 %v802, %v870
      %v872 = vpop.f32.mrf.mxu0
      %873 = vdwg.mxu0
      %874 = vst [vmem:[#allocation9] sm:$0x3] %v871
    $region45: #{mymodel2_head.1} parent=1 // pred_fallthru
      _
    // Predicated region
    $region46: #{mymodel2_head.1} parent=1 // pred_check
      _
    $region47: #{mymodel2_head.1} parent=1 // pred_check_branch
      %876 = sbr.rel (0) target = $region49
    $region48: #{mymodel2_head.1} parent=1 // pred_region
      %s878 = ssub.s32 32, 32
      %879 = vsyncadd [#allocation5], %s878
      %s881 = sshll.u32 [#allocation9], 4
      %s882 = int_to_ptr.vmem [resolvable:$true] %s881
      %884 = dma.vmem_to_hbm [thread:$0]  %s882, 32, %s6, [#allocation5]
    $region49: #{mymodel2_head.1} parent=1 // pred_fallthru
      _
    // Predicated region
    $region50: #{mymodel2_head.1} parent=1 // pred_check
      _
    $region51: #{mymodel2_head.1} parent=1 // pred_check_branch
      %886 = sbr.rel (0) target = $region53
    $region52: #{mymodel2_head.1} parent=1 // pred_region
      %s888 = ssub.s32 64, 64
      %889 = vsyncadd [#allocation11], %s888
      %s891 = sshll.u32 [#allocation10], 4
      %s892 = int_to_ptr.vmem [resolvable:$true] %s891
      %894 = dma.vmem_to_hbm [thread:$0]  %s892, 64, %s7, [#allocation11]
    $region53: #{mymodel2_head.1} parent=1 // pred_fallthru
      _
    // Predicated region
    $region54: #{mymodel2_head.1} parent=1 // pred_check
      _
    $region55: #{mymodel2_head.1} parent=1 // pred_check_branch
      %896 = sbr.rel (0) target = $region57
    $region56: #{mymodel2_head.1} parent=1 // pred_region
      %897 = dma.done [#allocation5], 32
    $region57: #{mymodel2_head.1} parent=1 // pred_fallthru
      _
    // Predicated region
    $region58: #{mymodel2_head.1} parent=1 // pred_check
      _
    $region59: #{mymodel2_head.1} parent=1 // pred_check_branch
      %899 = sbr.rel (0) target = $region61
    $region60: #{mymodel2_head.1} parent=1 // pred_region
      %900 = dma.done [#allocation11], 64
    $region61: #{mymodel2_head.1} parent=1 // pred_fallthru
      _
    %901 = vsyncpa [#allocation4], 1
    %902 = vsyncpa [#allocation7], 1
    %903 = vsyncpa [#allocation5], 1
    %904 = vsyncpa [#allocation11], 1

</llo_original>
